<compile_context>
chip_gen: v5e
topology: v5e:2x2
jax: 0.10.0
libtpu: 0.0.40
codegen_flags: <defaults>
</compile_context>

<pallas_src>
import functools

import jax
import jax.numpy as jnp
from jax.experimental import pallas as pl
from jax.experimental.pallas import tpu as pltpu

_HALO = 128  # halo block width along L (covers taps with K - 1 <= 128)


def _im2col(x_ref, xh_ref, xs_ref, *, K, C_in, C_pad, L_TILE):
    """Scatter the K shifted x windows into the (K*C_pad, L_TILE) MXU operand scratch.

    Row block k (sublane-aligned offset k*C_pad) holds x[:, k : k + L_TILE]; rows
    [k*C_pad + C_in, (k+1)*C_pad) stay zero and multiply zero weight columns.
    """
    if C_pad != C_in:
        xs_ref[...] = jnp.zeros_like(xs_ref)   # keep pad rows finite (0 * NaN == NaN)
    for k in range(K):                         # small static K -> unrolled
        r = k * C_pad
        if xh_ref is None or k == 0:
            xs_ref[r:r + C_in, :] = x_ref[:, k:k + L_TILE]
        else:
            xs_ref[r:r + C_in, 0:L_TILE - k] = x_ref[:, k:L_TILE]
            xs_ref[r:r + C_in, L_TILE - k:L_TILE] = xh_ref[:, 0:k]


def _conv_tile(x_ref, xh_ref, w_ref, xs_ref, *, K, C_in, C_pad, L_TILE):
    """Valid Conv1d for one (batch-row, L-tile) as a single MXU matmul -> f32 (C_out, L_TILE)."""
    _im2col(x_ref, xh_ref, xs_ref, K=K, C_in=C_in, C_pad=C_pad, L_TILE=L_TILE)
    return jnp.dot(w_ref[...], xs_ref[...], preferred_element_type=jnp.float32)


def _conv_stats_kernel(*refs, K, C_in, C_pad, L_TILE, l_out, n_lt, has_halo, ragged):
    """Pass 1: per-batch per-channel sum / sum-of-squares of the conv output."""
    if has_halo:
        x_ref, xh_ref, w_ref, s_ref, q_ref, xs_ref = refs
    else:
        x_ref, w_ref, s_ref, q_ref, xs_ref = refs
        xh_ref = None
    lt = pl.program_id(1)

    @pl.when(lt == 0)
    def _init():
        s_ref[...] = jnp.zeros_like(s_ref)
        q_ref[...] = jnp.zeros_like(q_ref)

    y = _conv_tile(x_ref, xh_ref, w_ref, xs_ref, K=K, C_in=C_in, C_pad=C_pad, L_TILE=L_TILE)

    def _acc(yv):
        s_ref[...] += jnp.sum(yv, axis=-1, keepdims=True)
        q_ref[...] += jnp.sum(yv * yv, axis=-1, keepdims=True)

    if not ragged:
        _acc(y)
    else:
        # Only the boundary L-tile needs the validity mask; interior tiles use plain sums.
        @pl.when(lt < n_lt - 1)
        def _interior():
            _acc(y)

        @pl.when(lt == n_lt - 1)
        def _boundary():
            col = lt * L_TILE + jax.lax.broadcasted_iota(jnp.int32, y.shape, 1)
            _acc(jnp.where(col < l_out, y, 0.0))


def _conv_norm_kernel(*refs, K, C_in, C_pad, L_TILE, has_halo):
    """Pass 2: recompute conv tile, folded BN affine (per-channel FMA) + ReLU, lane-dense store."""
    if has_halo:
        x_ref, xh_ref, w_ref, scale_ref, shift_ref, o_ref, xs_ref = refs
    else:
        x_ref, w_ref, scale_ref, shift_ref, o_ref, xs_ref = refs
        xh_ref = None
    y = _conv_tile(x_ref, xh_ref, w_ref, xs_ref, K=K, C_in=C_in, C_pad=C_pad, L_TILE=L_TILE)
    z = y * scale_ref[...] + shift_ref[...]            # (C_out, L_TILE) <- (C_out, 1) broadcast
    o_ref[...] = jnp.maximum(z, 0.0).astype(o_ref.dtype)


@functools.partial(jax.jit, static_argnames=("eps", "matmul_dtype", "l_tile_max"))
def conv_batch_norm(x_ncl, w_oik, b, gamma, beta, *, eps: float = 1e-5,
                    matmul_dtype=jnp.bfloat16, l_tile_max: int = 8192):
    """x_ncl: (N, C_in, L); w_oik: (C_out, C_in, K); b/gamma/beta: (C_out,).
    Returns (N, C_out, L_out) with L_out = L - K + 1 (PyTorch Conv1d 'valid' conv),
    normalized with train-mode (batch) statistics and passed through ReLU."""
    N, C_in, L = x_ncl.shape
    C_out, _, K = w_oik.shape
    L_out = L - K + 1
    assert L_out >= 1 and K >= 1
    assert K - 1 <= _HALO, "kernel_size - 1 must be <= 128"
    assert l_tile_max >= 128 and l_tile_max % 128 == 0

    # Conv1d bias is cancelled exactly by BatchNorm's batch-mean subtraction -> drop it.
    del b

    # Pre-cast MXU operands once in the wrapper (no in-kernel casts; no forced f32 upcast).
    x = x_ncl if x_ncl.dtype == matmul_dtype else x_ncl.astype(matmul_dtype)

    # Folded conv weight: (C_out, K*C_pad), column k*C_pad + i <-> tap k, in-channel i.
    # C_pad keeps each tap's row block sublane-aligned in the im2col scratch.
    C_pad = -(-C_in // 16) * 16
    wt = jnp.transpose(w_oik, (0, 2, 1))                    # (C_out, K, C_in), tiny
    if C_pad != C_in:
        wt = jnp.pad(wt, ((0, 0), (0, 0), (0, C_pad - C_in)))
    w_flat = wt.reshape(C_out, K * C_pad).astype(matmul_dtype)

    x_bpe = jnp.dtype(matmul_dtype).itemsize

    def _step_bytes(t):  # double-buffered x (+halo) + out tile + im2col scratch + weights
        return (2 * C_in * (t + _HALO) * x_bpe + 2 * C_out * t * 4
                + K * C_pad * t * x_bpe + 2 * C_out * K * C_pad * x_bpe + (1 << 20))

    # L tile: multiple of 128, shrunk until the per-step working set is modest.
    l_tile = l_tile_max
    while l_tile > 128 and _step_bytes(l_tile) > (24 << 20):
        l_tile = max(128, (l_tile // 2) // 128 * 128)

    if L_out <= l_tile:
        # Single L-tile per batch row: the whole (valid) row is one block, no halo needed.
        has_halo, ragged = False, False
        l_tile, n_lt = L_out, 1
        x_specs = [pl.BlockSpec((None, C_in, L), lambda n, lt: (n, 0, 0))]
        x_args = (x,)
    else:
        has_halo = True
        n_lt = pl.cdiv(L_out, l_tile)
        ragged = (n_lt * l_tile != L_out)
        hb = l_tile // _HALO
        n_hb = pl.cdiv(L, _HALO)
        x_specs = [
            pl.BlockSpec((None, C_in, l_tile), lambda n, lt: (n, 0, lt)),
            # 128-wide halo taken from the next tile, clamped at the end of x.  Clamped or
            # boundary-partial contents only ever feed conv columns >= L_out, which are
            # masked out of the statistics and clipped off the boundary output block.
            pl.BlockSpec((None, C_in, _HALO),
                         lambda n, lt: (n, 0, jnp.minimum((lt + 1) * hb, n_hb - 1))),
        ]
        x_args = (x, x)

    grid = (N, n_lt)
    w_spec = pl.BlockSpec((C_out, K * C_pad), lambda n, lt: (0, 0))
    col_spec = pl.BlockSpec((C_out, 1), lambda n, lt: (0, 0))            # scale / shift
    bstat_spec = pl.BlockSpec((None, C_out, 1), lambda n, lt: (n, 0, 0))  # per-batch partials
    scratch = [pltpu.VMEM((K * C_pad, l_tile), matmul_dtype)]

    # Derived VMEM budget with headroom; <= 48 MiB stays safe on v7x (64 MiB physical per TC).
    vmem_limit = int(min(max(3 * _step_bytes(l_tile) // 2 + (8 << 20), 32 << 20), 48 << 20))

    # ---------------- pass 1: batch statistics (per-batch partials, megacore-parallel) -------
    ps, pq = pl.pallas_call(
        functools.partial(_conv_stats_kernel, K=K, C_in=C_in, C_pad=C_pad, L_TILE=l_tile,
                          l_out=L_out, n_lt=n_lt, has_halo=has_halo, ragged=ragged),
        grid=grid,
        in_specs=x_specs + [w_spec],
        out_specs=(bstat_spec, bstat_spec),
        out_shape=(jax.ShapeDtypeStruct((N, C_out, 1), jnp.float32),
                   jax.ShapeDtypeStruct((N, C_out, 1), jnp.float32)),
        scratch_shapes=scratch,
        compiler_params=pltpu.CompilerParams(
            dimension_semantics=("parallel", "arbitrary"),
            vmem_limit_bytes=vmem_limit),
    )(*x_args, w_flat)

    # Reduce the tiny per-batch partials and fold BN into a single per-channel scale/shift.
    # NOTE: variance = E[y^2] - E[y]^2 with f32 partials; dropping the conv bias keeps |mean|
    # small, which limits cancellation.
    s = jnp.sum(ps, axis=0)                                 # (C_out, 1)
    sq = jnp.sum(pq, axis=0)
    cnt = jnp.float32(N * L_out)
    mean = s / cnt
    var = jnp.maximum(sq / cnt - mean * mean, 0.0)          # biased (train-mode) variance
    inv = jax.lax.rsqrt(var + eps)
    scale = gamma.reshape(C_out, 1).astype(jnp.float32) * inv
    shift = beta.reshape(C_out, 1).astype(jnp.float32) - mean * scale

    # ---------------- pass 2: conv + folded BN affine + ReLU ----------------
    o_spec = pl.BlockSpec((None, C_out, l_tile), lambda n, lt: (n, 0, lt))
    out = pl.pallas_call(
        functools.partial(_conv_norm_kernel, K=K, C_in=C_in, C_pad=C_pad, L_TILE=l_tile,
                          has_halo=has_halo),
        grid=grid,
        in_specs=x_specs + [w_spec, col_spec, col_spec],
        out_specs=o_spec,
        out_shape=jax.ShapeDtypeStruct((N, C_out, L_out), jnp.float32),
        scratch_shapes=scratch,
        compiler_params=pltpu.CompilerParams(
            dimension_semantics=("parallel", "parallel"),
            vmem_limit_bytes=vmem_limit),
    )(*x_args, w_flat, scale, shift)
    return out


def _reference(x_ncl, w_oik, b, gamma, beta, eps=1e-5):
    y = jax.lax.conv_general_dilated(
        x_ncl, w_oik, window_strides=(1,), padding="VALID",
        dimension_numbers=("NCH", "OIH", "NCH"))
    y = y + b[None, :, None]
    mean = y.mean(axis=(0, 2), keepdims=True)
    var = ((y - mean) ** 2).mean(axis=(0, 2), keepdims=True)
    yn = (y - mean) / jnp.sqrt(var + eps) * gamma[None, :, None] + beta[None, :, None]
    return jnp.maximum(yn, 0.0)


if __name__ == "__main__":
    # Small shapes consistent with Conv1d/BatchNorm1d: batch=2, C_in=4, C_out=8, L=16, K=3.
    N, C_in, C_out, L, K = 2, 4, 8, 16, 3
    key = jax.random.PRNGKey(0)
    kx, kw, kb, kg, kbt = jax.random.split(key, 5)

    x = jax.random.normal(kx, (N, C_in, L), jnp.float32)
    w = 0.1 * jax.random.normal(kw, (C_out, C_in, K), jnp.float32)     # Conv1d weight
    b = 0.1 * jax.random.normal(kb, (C_out,), jnp.float32)             # Conv1d bias
    gamma = 1.0 + 0.1 * jax.random.normal(kg, (C_out,), jnp.float32)   # BN weight
    beta = 0.1 * jax.random.normal(kbt, (C_out,), jnp.float32)         # BN bias

    ref = jax.block_until_ready(_reference(x, w, b, gamma, beta))

    # f32 MXU operands: tight check against the f32 reference (single-L-tile path).
    out_f32 = jax.block_until_ready(
        conv_batch_norm(x, w, b, gamma, beta, matmul_dtype=jnp.float32))
    assert out_f32.shape == (N, C_out, L - K + 1), out_f32.shape
    assert jnp.allclose(out_f32, ref, atol=1e-4, rtol=1e-4), \
        float(jnp.max(jnp.abs(out_f32 - ref)))

    # Default bf16 MXU operands (v6e/v7x fast path), f32 accumulation: looser tolerance.
    out_bf16 = jax.block_until_ready(conv_batch_norm(x, w, b, gamma, beta))
    assert jnp.allclose(out_bf16, ref, atol=5e-2, rtol=5e-2), \
        float(jnp.max(jnp.abs(out_bf16 - ref)))

    # Multi-L-tile halo path with a ragged boundary tile (L_out = 298 over 128-wide tiles).
    L2 = 300
    x2 = jax.random.normal(kx, (N, C_in, L2), jnp.float32)
    ref2 = jax.block_until_ready(_reference(x2, w, b, gamma, beta))
    out2 = jax.block_until_ready(
        conv_batch_norm(x2, w, b, gamma, beta, matmul_dtype=jnp.float32, l_tile_max=128))
    assert out2.shape == (N, C_out, L2 - K + 1), out2.shape
    assert jnp.allclose(out2, ref2, atol=1e-4, rtol=1e-4), \
        float(jnp.max(jnp.abs(out2 - ref2)))

    # Multi-L-tile halo path with an exact tile multiple (L_out = 256 = 2*128, no masking).
    L3 = 258
    x3 = jax.random.normal(kx, (N, C_in, L3), jnp.float32)
    ref3 = jax.block_until_ready(_reference(x3, w, b, gamma, beta))
    out3 = jax.block_until_ready(
        conv_batch_norm(x3, w, b, gamma, beta, matmul_dtype=jnp.float32, l_tile_max=128))
    assert out3.shape == (N, C_out, L3 - K + 1), out3.shape
    assert jnp.allclose(out3, ref3, atol=1e-4, rtol=1e-4), \
        float(jnp.max(jnp.abs(out3 - ref3)))

    print("KERNEL_OK")
</pallas_src>

<mosaic_0001>
module attributes {stable_mosaic.version = 11 : i64} {
  func.func @_conv_stats_kernel(%arg0: i32, %arg1: i32, %arg2: memref<1x4x16xf32, #tpu.memory_space<vmem>>, %arg3: memref<8x48xf32, #tpu.memory_space<vmem>>, %arg4: memref<1x8x1xf32, #tpu.memory_space<vmem>>, %arg5: memref<1x8x1xf32, #tpu.memory_space<vmem>>, %arg6: memref<48x14xf32, #tpu.memory_space<vmem>>) attributes {dimension_semantics = [#tpu.dimension_semantics<parallel>, #tpu.dimension_semantics<arbitrary>], iteration_bounds = array<i64: 2, 1>, scalar_prefetch = 0 : i64, scratch_operands = 1 : i64, tpu.core_type = #tpu.core_type<tc>, window_params = [{transform_indices = @transform_0, window_bounds = array<i64: 1, 4, 16>}, {pipeline_mode = #tpu.pipeline_mode<synchronous>, transform_indices = @transform_1, window_bounds = array<i64: 8, 48>}, {transform_indices = @transform_2, window_bounds = array<i64: 1, 8, 1>}, {transform_indices = @transform_3, window_bounds = array<i64: 1, 8, 1>}]} {
    %c0_i32 = arith.constant 0 : i32
    %0 = arith.cmpi eq, %arg1, %c0_i32 : i32
    %1 = arith.extui %0 : i1 to i32
    %c0_i32_0 = arith.constant 0 : i32
    %2 = arith.cmpi ne, %1, %c0_i32_0 : i32
    scf.if %2 {
      %cst_32 = arith.constant 0.000000e+00 : f32
      %34 = vector.broadcast %cst_32 : f32 to vector<8x1xf32>
      %c0_33 = arith.constant 0 : index
      %c0_34 = arith.constant 0 : index
      %c0_35 = arith.constant 0 : index
      %35 = vector.load %arg4[%c0_33, %c0_34, %c0_35] : memref<1x8x1xf32, #tpu.memory_space<vmem>>, vector<1x8x1xf32>
      %36 = vector.shape_cast %35 : vector<1x8x1xf32> to vector<8x1xf32>
      %37 = vector.shape_cast %34 : vector<8x1xf32> to vector<1x8x1xf32>
      tpu.vector_store %arg4[%c0_33, %c0_34, %c0_35], %37 {strides = array<i32>} : memref<1x8x1xf32, #tpu.memory_space<vmem>>, vector<1x8x1xf32>,
      %cst_36 = arith.constant 0.000000e+00 : f32
      %38 = vector.broadcast %cst_36 : f32 to vector<8x1xf32>
      %c0_37 = arith.constant 0 : index
      %c0_38 = arith.constant 0 : index
      %c0_39 = arith.constant 0 : index
      %39 = vector.load %arg5[%c0_37, %c0_38, %c0_39] : memref<1x8x1xf32, #tpu.memory_space<vmem>>, vector<1x8x1xf32>
      %40 = vector.shape_cast %39 : vector<1x8x1xf32> to vector<8x1xf32>
      %41 = vector.shape_cast %38 : vector<8x1xf32> to vector<1x8x1xf32>
      tpu.vector_store %arg5[%c0_37, %c0_38, %c0_39], %41 {strides = array<i32>} : memref<1x8x1xf32, #tpu.memory_space<vmem>>, vector<1x8x1xf32>,
    } else {
    }
    %cst = arith.constant 0.000000e+00 : f32
    %3 = vector.broadcast %cst : f32 to vector<48x14xf32>
    %c0 = arith.constant 0 : index
    %c0_1 = arith.constant 0 : index
    %4 = vector.load %arg6[%c0, %c0_1] : memref<48x14xf32, #tpu.memory_space<vmem>>, vector<48x14xf32>
    tpu.vector_store %arg6[%c0, %c0_1], %3 {strides = array<i32>} : memref<48x14xf32, #tpu.memory_space<vmem>>, vector<48x14xf32>,
    %c0_2 = arith.constant 0 : index
    %c0_3 = arith.constant 0 : index
    %c0_4 = arith.constant 0 : index
    %5 = vector.load %arg2[%c0_2, %c0_3, %c0_4] : memref<1x4x16xf32, #tpu.memory_space<vmem>>, vector<1x4x14xf32>
    %6 = vector.shape_cast %5 : vector<1x4x14xf32> to vector<4x14xf32>
    %c0_5 = arith.constant 0 : index
    %c0_6 = arith.constant 0 : index
    %7 = vector.load %arg6[%c0_5, %c0_6] : memref<48x14xf32, #tpu.memory_space<vmem>>, vector<4x14xf32>
    tpu.vector_store %arg6[%c0_5, %c0_6], %6 {strides = array<i32>} : memref<48x14xf32, #tpu.memory_space<vmem>>, vector<4x14xf32>,
    %c0_7 = arith.constant 0 : index
    %c0_8 = arith.constant 0 : index
    %c1 = arith.constant 1 : index
    %8 = vector.load %arg2[%c0_7, %c0_8, %c1] : memref<1x4x16xf32, #tpu.memory_space<vmem>>, vector<1x4x14xf32>
    %9 = vector.shape_cast %8 : vector<1x4x14xf32> to vector<4x14xf32>
    %c16 = arith.constant 16 : index
    %c0_9 = arith.constant 0 : index
    %10 = vector.load %arg6[%c16, %c0_9] : memref<48x14xf32, #tpu.memory_space<vmem>>, vector<4x14xf32>
    tpu.vector_store %arg6[%c16, %c0_9], %9 {strides = array<i32>} : memref<48x14xf32, #tpu.memory_space<vmem>>, vector<4x14xf32>,
    %c0_10 = arith.constant 0 : index
    %c0_11 = arith.constant 0 : index
    %c2 = arith.constant 2 : index
    %11 = vector.load %arg2[%c0_10, %c0_11, %c2] : memref<1x4x16xf32, #tpu.memory_space<vmem>>, vector<1x4x14xf32>
    %12 = vector.shape_cast %11 : vector<1x4x14xf32> to vector<4x14xf32>
    %c32 = arith.constant 32 : index
    %c0_12 = arith.constant 0 : index
    %13 = vector.load %arg6[%c32, %c0_12] : memref<48x14xf32, #tpu.memory_space<vmem>>, vector<4x14xf32>
    tpu.vector_store %arg6[%c32, %c0_12], %12 {strides = array<i32>} : memref<48x14xf32, #tpu.memory_space<vmem>>, vector<4x14xf32>,
    %c0_13 = arith.constant 0 : index
    %c0_14 = arith.constant 0 : index
    %14 = vector.load %arg3[%c0_13, %c0_14] : memref<8x48xf32, #tpu.memory_space<vmem>>, vector<8x48xf32>
    %c0_15 = arith.constant 0 : index
    %c0_16 = arith.constant 0 : index
    %15 = vector.load %arg6[%c0_15, %c0_16] : memref<48x14xf32, #tpu.memory_space<vmem>>, vector<48x14xf32>
    %cst_17 = arith.constant dense<0.000000e+00> : vector<8x14xf32>
    %16 = tpu.matmul %14, %15, %cst_17 {dimension_numbers = #tpu.dot_dimension_numbers<[1], [0], [0], [1], [0, 0, 1, 1], [], []>} : vector<8x48xf32>, vector<48x14xf32>, vector<8x14xf32> -> vector<8x14xf32>
    %c0_18 = arith.constant 0 : index
    %c0_19 = arith.constant 0 : index
    %c0_20 = arith.constant 0 : index
    %17 = vector.load %arg4[%c0_18, %c0_19, %c0_20] : memref<1x8x1xf32, #tpu.memory_space<vmem>>, vector<1x8x1xf32>
    %18 = vector.shape_cast %17 : vector<1x8x1xf32> to vector<8x1xf32>
    %cst_21 = arith.constant dense<0.000000e+00> : vector<8xf32>
    %19 = vector.multi_reduction <add>, %16, %cst_21 [1] : vector<8x14xf32> to vector<8xf32>
    %20 = vector.shape_cast %19 : vector<8xf32> to vector<8x1xf32>
    %21 = arith.addf %18, %20 : vector<8x1xf32>
    %c0_22 = arith.constant 0 : index
    %c0_23 = arith.constant 0 : index
    %c0_24 = arith.constant 0 : index
    %22 = vector.load %arg4[%c0_22, %c0_23, %c0_24] : memref<1x8x1xf32, #tpu.memory_space<vmem>>, vector<1x8x1xf32>
    %23 = vector.shape_cast %22 : vector<1x8x1xf32> to vector<8x1xf32>
    %24 = vector.shape_cast %21 : vector<8x1xf32> to vector<1x8x1xf32>
    tpu.vector_store %arg4[%c0_22, %c0_23, %c0_24], %24 {strides = array<i32>} : memref<1x8x1xf32, #tpu.memory_space<vmem>>, vector<1x8x1xf32>,
    %c0_25 = arith.constant 0 : index
    %c0_26 = arith.constant 0 : index
    %c0_27 = arith.constant 0 : index
    %25 = vector.load %arg5[%c0_25, %c0_26, %c0_27] : memref<1x8x1xf32, #tpu.memory_space<vmem>>, vector<1x8x1xf32>
    %26 = vector.shape_cast %25 : vector<1x8x1xf32> to vector<8x1xf32>
    %27 = arith.mulf %16, %16 : vector<8x14xf32>
    %cst_28 = arith.constant dense<0.000000e+00> : vector<8xf32>
    %28 = vector.multi_reduction <add>, %27, %cst_28 [1] : vector<8x14xf32> to vector<8xf32>
    %29 = vector.shape_cast %28 : vector<8xf32> to vector<8x1xf32>
    %30 = arith.addf %26, %29 : vector<8x1xf32>
    %c0_29 = arith.constant 0 : index
    %c0_30 = arith.constant 0 : index
    %c0_31 = arith.constant 0 : index
    %31 = vector.load %arg5[%c0_29, %c0_30, %c0_31] : memref<1x8x1xf32, #tpu.memory_space<vmem>>, vector<1x8x1xf32>
    %32 = vector.shape_cast %31 : vector<1x8x1xf32> to vector<8x1xf32>
    %33 = vector.shape_cast %30 : vector<8x1xf32> to vector<1x8x1xf32>
    tpu.vector_store %arg5[%c0_29, %c0_30, %c0_31], %33 {strides = array<i32>} : memref<1x8x1xf32, #tpu.memory_space<vmem>>, vector<1x8x1xf32>,
    return
  }
  func.func @transform_0(%arg0: i32, %arg1: i32) -> (i32, i32, i32) {
    %c0_i32 = arith.constant 0 : i32
    %c0_i32_0 = arith.constant 0 : i32
    %c0_i32_1 = arith.constant 0 : i32
    return %arg0, %c0_i32, %c0_i32_0 : i32, i32, i32
  }
  func.func @transform_1(%arg0: i32, %arg1: i32) -> (i32, i32) {
    %c0_i32 = arith.constant 0 : i32
    %c0_i32_0 = arith.constant 0 : i32
    %c0_i32_1 = arith.constant 0 : i32
    return %c0_i32, %c0_i32_0 : i32, i32
  }
  func.func @transform_2(%arg0: i32, %arg1: i32) -> (i32, i32, i32) {
    %c0_i32 = arith.constant 0 : i32
    %c0_i32_0 = arith.constant 0 : i32
    %c0_i32_1 = arith.constant 0 : i32
    return %arg0, %c0_i32, %c0_i32_0 : i32, i32, i32
  }
  func.func @transform_3(%arg0: i32, %arg1: i32) -> (i32, i32, i32) {
    %c0_i32 = arith.constant 0 : i32
    %c0_i32_0 = arith.constant 0 : i32
    %c0_i32_1 = arith.constant 0 : i32
    return %arg0, %c0_i32, %c0_i32_0 : i32, i32, i32
  }
}

module attributes {stable_mosaic.version = 11 : i64} {
  func.func @_conv_norm_kernel(%arg0: i32, %arg1: i32, %arg2: memref<1x4x16xf32, #tpu.memory_space<vmem>>, %arg3: memref<8x48xf32, #tpu.memory_space<vmem>>, %arg4: memref<8x1xf32, #tpu.memory_space<vmem>>, %arg5: memref<8x1xf32, #tpu.memory_space<vmem>>, %arg6: memref<1x8x14xf32, #tpu.memory_space<vmem>>, %arg7: memref<48x14xf32, #tpu.memory_space<vmem>>) attributes {dimension_semantics = [#tpu.dimension_semantics<parallel>, #tpu.dimension_semantics<parallel>], iteration_bounds = array<i64: 2, 1>, scalar_prefetch = 0 : i64, scratch_operands = 1 : i64, tpu.core_type = #tpu.core_type<tc>, window_params = [{transform_indices = @transform_0, window_bounds = array<i64: 1, 4, 16>}, {pipeline_mode = #tpu.pipeline_mode<synchronous>, transform_indices = @transform_1, window_bounds = array<i64: 8, 48>}, {pipeline_mode = #tpu.pipeline_mode<synchronous>, transform_indices = @transform_2, window_bounds = array<i64: 8, 1>}, {pipeline_mode = #tpu.pipeline_mode<synchronous>, transform_indices = @transform_3, window_bounds = array<i64: 8, 1>}, {transform_indices = @transform_4, window_bounds = array<i64: 1, 8, 14>}]} {
    %cst = arith.constant 0.000000e+00 : f32
    %0 = vector.broadcast %cst : f32 to vector<48x14xf32>
    %c0 = arith.constant 0 : index
    %c0_0 = arith.constant 0 : index
    %1 = vector.load %arg7[%c0, %c0_0] : memref<48x14xf32, #tpu.memory_space<vmem>>, vector<48x14xf32>
    tpu.vector_store %arg7[%c0, %c0_0], %0 {strides = array<i32>} : memref<48x14xf32, #tpu.memory_space<vmem>>, vector<48x14xf32>,
    %c0_1 = arith.constant 0 : index
    %c0_2 = arith.constant 0 : index
    %c0_3 = arith.constant 0 : index
    %2 = vector.load %arg2[%c0_1, %c0_2, %c0_3] : memref<1x4x16xf32, #tpu.memory_space<vmem>>, vector<1x4x14xf32>
    %3 = vector.shape_cast %2 : vector<1x4x14xf32> to vector<4x14xf32>
    %c0_4 = arith.constant 0 : index
    %c0_5 = arith.constant 0 : index
    %4 = vector.load %arg7[%c0_4, %c0_5] : memref<48x14xf32, #tpu.memory_space<vmem>>, vector<4x14xf32>
    tpu.vector_store %arg7[%c0_4, %c0_5], %3 {strides = array<i32>} : memref<48x14xf32, #tpu.memory_space<vmem>>, vector<4x14xf32>,
    %c0_6 = arith.constant 0 : index
    %c0_7 = arith.constant 0 : index
    %c1 = arith.constant 1 : index
    %5 = vector.load %arg2[%c0_6, %c0_7, %c1] : memref<1x4x16xf32, #tpu.memory_space<vmem>>, vector<1x4x14xf32>
    %6 = vector.shape_cast %5 : vector<1x4x14xf32> to vector<4x14xf32>
    %c16 = arith.constant 16 : index
    %c0_8 = arith.constant 0 : index
    %7 = vector.load %arg7[%c16, %c0_8] : memref<48x14xf32, #tpu.memory_space<vmem>>, vector<4x14xf32>
    tpu.vector_store %arg7[%c16, %c0_8], %6 {strides = array<i32>} : memref<48x14xf32, #tpu.memory_space<vmem>>, vector<4x14xf32>,
    %c0_9 = arith.constant 0 : index
    %c0_10 = arith.constant 0 : index
    %c2 = arith.constant 2 : index
    %8 = vector.load %arg2[%c0_9, %c0_10, %c2] : memref<1x4x16xf32, #tpu.memory_space<vmem>>, vector<1x4x14xf32>
    %9 = vector.shape_cast %8 : vector<1x4x14xf32> to vector<4x14xf32>
    %c32 = arith.constant 32 : index
    %c0_11 = arith.constant 0 : index
    %10 = vector.load %arg7[%c32, %c0_11] : memref<48x14xf32, #tpu.memory_space<vmem>>, vector<4x14xf32>
    tpu.vector_store %arg7[%c32, %c0_11], %9 {strides = array<i32>} : memref<48x14xf32, #tpu.memory_space<vmem>>, vector<4x14xf32>,
    %c0_12 = arith.constant 0 : index
    %c0_13 = arith.constant 0 : index
    %11 = vector.load %arg3[%c0_12, %c0_13] : memref<8x48xf32, #tpu.memory_space<vmem>>, vector<8x48xf32>
    %c0_14 = arith.constant 0 : index
    %c0_15 = arith.constant 0 : index
    %12 = vector.load %arg7[%c0_14, %c0_15] : memref<48x14xf32, #tpu.memory_space<vmem>>, vector<48x14xf32>
    %cst_16 = arith.constant dense<0.000000e+00> : vector<8x14xf32>
    %13 = tpu.matmul %11, %12, %cst_16 {dimension_numbers = #tpu.dot_dimension_numbers<[1], [0], [0], [1], [0, 0, 1, 1], [], []>} : vector<8x48xf32>, vector<48x14xf32>, vector<8x14xf32> -> vector<8x14xf32>
    %c0_17 = arith.constant 0 : index
    %c0_18 = arith.constant 0 : index
    %14 = vector.load %arg4[%c0_17, %c0_18] : memref<8x1xf32, #tpu.memory_space<vmem>>, vector<8x1xf32>
    %15 = vector.broadcast %14 : vector<8x1xf32> to vector<8x14xf32>
    %16 = arith.mulf %13, %15 : vector<8x14xf32>
    %c0_19 = arith.constant 0 : index
    %c0_20 = arith.constant 0 : index
    %17 = vector.load %arg5[%c0_19, %c0_20] : memref<8x1xf32, #tpu.memory_space<vmem>>, vector<8x1xf32>
    %18 = vector.broadcast %17 : vector<8x1xf32> to vector<8x14xf32>
    %19 = arith.addf %16, %18 : vector<8x14xf32>
    %cst_21 = arith.constant 0.000000e+00 : f32
    %20 = vector.broadcast %cst_21 : f32 to vector<8x14xf32>
    %21 = arith.maximumf %19, %20 : vector<8x14xf32>
    %c0_22 = arith.constant 0 : index
    %c0_23 = arith.constant 0 : index
    %c0_24 = arith.constant 0 : index
    %22 = vector.load %arg6[%c0_22, %c0_23, %c0_24] : memref<1x8x14xf32, #tpu.memory_space<vmem>>, vector<1x8x14xf32>
    %23 = vector.shape_cast %22 : vector<1x8x14xf32> to vector<8x14xf32>
    %24 = vector.shape_cast %21 : vector<8x14xf32> to vector<1x8x14xf32>
    tpu.vector_store %arg6[%c0_22, %c0_23, %c0_24], %24 {strides = array<i32>} : memref<1x8x14xf32, #tpu.memory_space<vmem>>, vector<1x8x14xf32>,
    return
  }
  func.func @transform_0(%arg0: i32, %arg1: i32) -> (i32, i32, i32) {
    %c0_i32 = arith.constant 0 : i32
    %c0_i32_0 = arith.constant 0 : i32
    %c0_i32_1 = arith.constant 0 : i32
    return %arg0, %c0_i32, %c0_i32_0 : i32, i32, i32
  }
  func.func @transform_1(%arg0: i32, %arg1: i32) -> (i32, i32) {
    %c0_i32 = arith.constant 0 : i32
    %c0_i32_0 = arith.constant 0 : i32
    %c0_i32_1 = arith.constant 0 : i32
    return %c0_i32, %c0_i32_0 : i32, i32
  }
  func.func @transform_2(%arg0: i32, %arg1: i32) -> (i32, i32) {
    %c0_i32 = arith.constant 0 : i32
    %c0_i32_0 = arith.constant 0 : i32
    %c0_i32_1 = arith.constant 0 : i32
    return %c0_i32, %c0_i32_0 : i32, i32
  }
  func.func @transform_3(%arg0: i32, %arg1: i32) -> (i32, i32) {
    %c0_i32 = arith.constant 0 : i32
    %c0_i32_0 = arith.constant 0 : i32
    %c0_i32_1 = arith.constant 0 : i32
    return %c0_i32, %c0_i32_0 : i32, i32
  }
  func.func @transform_4(%arg0: i32, %arg1: i32) -> (i32, i32, i32) {
    %c0_i32 = arith.constant 0 : i32
    %c0_i32_0 = arith.constant 0 : i32
    return %arg0, %c0_i32, %arg1 : i32, i32, i32
  }
}

</mosaic_0001>

<llo_original>
// kernel: conv_batch_norm.2
$region0: #{conv_batch_norm.2}
  #allocation0 [shape = 'u32[]', space=smem, size = 0x4, offset = 0x4, fixed_abs, tag = 'smem constant byte address 0x4 - core index']
  #allocation1 [shape = 'u32[72,128]{1,0:T(1,128)}', space=vmem, size = 0x9000, scoped, tag = 'internal scratch']
  #allocation2 [shape = 'f32[48,14]{1,0:T(8,128)}', space=vmem, size = 0x6000, scoped, tag = 'scratch operand']
  %s0 = inlined_call_operand.vmem [shape: f32[2,4,16], index: 0, kind: input, shape index: {}]
  %s1 = inlined_call_operand.vmem [shape: f32[8,48], index: 1, kind: input, shape index: {}]
  %s2 = inlined_call_operand.vmem [shape: f32[2,8,1], index: 2, kind: output, shape index: {0}]
  %s3 = inlined_call_operand.vmem [shape: f32[2,8,1], index: 3, kind: output, shape index: {1}]
  %4 = xla_tuple %s2, %s3
  %s5 = sld [smem:[#allocation0]]
  $region53: #{conv_batch_norm.2} parent=0
    _
  %s7 = ssub.s32 1, %s5
  %s8 = scalar_select 0, %s7, %s5
  loop: start=0, step=1, limit=4
  $region2: #{conv_batch_norm.2} parent=0 // loop_pre_header
    _
  $region3: #{conv_batch_norm.2} parent=0 // loop_header
    %s10 = sphi 0, %s14
    %p11 = scmp.ge.s32.totalorder %s10, 4
    %s17 = sphi 0, %s29
    %s18 = sphi 0, %s25
    %s19 = sphi 0, %s17
    %s20 = sphi 0, %s18
    %s21 = sphi 0, %s19
    %s22 = sphi 0, %s20
    %s32 = sphi 0, %s34
    %s35 = sphi 0, %s32
    %s36 = sphi 0, %s35
    %s52 = sphi 0, %s36
    %s56 = sphi 0, %s56
    %s58 = sphi 0, %s56
    %s59 = sphi 0, %s58
    %s73 = sphi 0, %s59
    %s79 = sphi 0, %s81
    %s82 = sphi 0, %s79
    %s83 = sphi 0, %s82
    %s99 = sphi 0, %s83
    %s105 = sphi 0, %s107
    %s108 = sphi 0, %s105
    %s109 = sphi 0, %s108
    %s125 = sphi 0, %s109
  $region4: #{conv_batch_norm.2} parent=0 // loop_header_branch
    %13 = sbr.rel (%p11) target = $region8
  $region5: #{conv_batch_norm.2} parent=0 // loop_body
    %s15 = ssub.s32 %s10, 1
    %s16 = ssub.s32 %s10, 2
    %s23 = sadd.s32 1, %s18
    %p24 = scmp.ge.s32.totalorder %s23, 1
    %s25 = scalar_select %p24, 0, %s23
    %s26 = sadd.s32 1, %s17
    %s27 = scalar_select %p24, %s26, %s17
    %p28 = scmp.ge.s32.totalorder %s27, 2
    %s29 = scalar_select %p28, 0, %s27
    %s30 = ssub.s32 %s17, %s29
    %p31 = scmp.eq.s32.totalorder %s30, 0
    %s33 = sadd.s32 %s32, 1
    %s34 = scalar_select %p31, %s32, %s33
    %p37 = pneg %p31
    %p38 = scmp.eq.s32.totalorder %s10, 1
    %p39 = por %p37, %p38
    %p40 = scmp.ne.s32.totalorder %s32, %s35
    %p41 = scmp.eq.s32.totalorder %s10, 0
    %p42 = por %p40, %p41
    %p43 = scmp.ne.s32.totalorder %s32, %s35
    %p44 = scmp.eq.s32.totalorder %s15, 1
    %p45 = por %p43, %p44
    %p46 = scmp.ne.s32.totalorder %s35, %s36
    %p47 = scmp.eq.s32.totalorder %s15, 0
    %p48 = por %p46, %p47
    %p49 = scmp.ne.s32.totalorder %s35, %s36
    %p50 = scmp.eq.s32.totalorder %s16, 1
    %p51 = por %p49, %p50
    %p53 = scmp.ne.s32.totalorder %s36, %s52
    %p54 = scmp.eq.s32.totalorder %s16, 0
    %p55 = por %p53, %p54
    %s57 = sadd.s32 %s56, 1
    %p60 = scmp.eq.s32.totalorder %s10, 1
    %p61 = scmp.ne.s32.totalorder %s56, %s58
    %p62 = scmp.eq.s32.totalorder %s10, 0
    %p63 = por %p61, %p62
    %p64 = scmp.ne.s32.totalorder %s56, %s58
    %p65 = scmp.eq.s32.totalorder %s15, 1
    %p66 = por %p64, %p65
    %p67 = scmp.ne.s32.totalorder %s58, %s59
    %p68 = scmp.eq.s32.totalorder %s15, 0
    %p69 = por %p67, %p68
    %p70 = scmp.ne.s32.totalorder %s58, %s59
    %p71 = scmp.eq.s32.totalorder %s16, 1
    %p72 = por %p70, %p71
    %p74 = scmp.ne.s32.totalorder %s59, %s73
    %p75 = scmp.eq.s32.totalorder %s16, 0
    %p76 = por %p74, %p75
    %s77 = ssub.s32 %s17, %s29
    %p78 = scmp.eq.s32.totalorder %s77, 0
    %s80 = sadd.s32 %s79, 1
    %s81 = scalar_select %p78, %s79, %s80
    %p84 = pneg %p78
    %p85 = scmp.eq.s32.totalorder %s10, 1
    %p86 = por %p84, %p85
    %p87 = scmp.ne.s32.totalorder %s79, %s82
    %p88 = scmp.eq.s32.totalorder %s10, 0
    %p89 = por %p87, %p88
    %p90 = scmp.ne.s32.totalorder %s79, %s82
    %p91 = scmp.eq.s32.totalorder %s15, 1
    %p92 = por %p90, %p91
    %p93 = scmp.ne.s32.totalorder %s82, %s83
    %p94 = scmp.eq.s32.totalorder %s15, 0
    %p95 = por %p93, %p94
    %p96 = scmp.ne.s32.totalorder %s82, %s83
    %p97 = scmp.eq.s32.totalorder %s16, 1
    %p98 = por %p96, %p97
    %p100 = scmp.ne.s32.totalorder %s83, %s99
    %p101 = scmp.eq.s32.totalorder %s16, 0
    %p102 = por %p100, %p101
    %s103 = ssub.s32 %s17, %s29
    %p104 = scmp.eq.s32.totalorder %s103, 0
    %s106 = sadd.s32 %s105, 1
    %s107 = scalar_select %p104, %s105, %s106
    %p110 = pneg %p104
    %p111 = scmp.eq.s32.totalorder %s10, 1
    %p112 = por %p110, %p111
    %p113 = scmp.ne.s32.totalorder %s105, %s108
    %p114 = scmp.eq.s32.totalorder %s10, 0
    %p115 = por %p113, %p114
    %p116 = scmp.ne.s32.totalorder %s105, %s108
    %p117 = scmp.eq.s32.totalorder %s15, 1
    %p118 = por %p116, %p117
    %p119 = scmp.ne.s32.totalorder %s108, %s109
    %p120 = scmp.eq.s32.totalorder %s15, 0
    %p121 = por %p119, %p120
    %p122 = scmp.ne.s32.totalorder %s108, %s109
    %p123 = scmp.eq.s32.totalorder %s16, 1
    %p124 = por %p122, %p123
    %p126 = scmp.ne.s32.totalorder %s109, %s125
    %p127 = scmp.eq.s32.totalorder %s16, 0
    %p128 = por %p126, %p127
    %p129 = scmp.le.s32.totalorder 1, %s10
    %p130 = scmp.lt.s32.totalorder %s10, 3
    %p131 = pnand %p129, %p130
    %p132 = pneg %p131
    // Predicated region
    $region9: #{conv_batch_norm.2} parent=5 // pred_check
      _
    $region10: #{conv_batch_norm.2} parent=5 // pred_check_branch
      %134 = sbr.rel (%p131) target = $region12
    $region11: #{conv_batch_norm.2} parent=5 // pred_region
      %s135 = ssub.s32 %s10, 1
      // Predicated region
      $region13: #{conv_batch_norm.2} parent=11 // pred_check
        %p136 = pneg %p69
      $region14: #{conv_batch_norm.2} parent=11 // pred_check_branch
        %138 = sbr.rel (%p136) target = $region16
      $region15: #{conv_batch_norm.2} parent=11 // pred_region
        _
      $region16: #{conv_batch_norm.2} parent=11 // pred_fallthru
        _
    $region12: #{conv_batch_norm.2} parent=5 // pred_fallthru
      _
    %p139 = scmp.lt.s32.totalorder %s10, 2
    // Predicated region
    $region17: #{conv_batch_norm.2} parent=5 // pred_check
      %p140 = pneg %p139
    $region18: #{conv_batch_norm.2} parent=5 // pred_check_branch
      %142 = sbr.rel (%p140) target = $region20
    $region19: #{conv_batch_norm.2} parent=5 // pred_region
      // Predicated region
      $region21: #{conv_batch_norm.2} parent=19 // pred_check
        %p143 = pneg %p42
      $region22: #{conv_batch_norm.2} parent=19 // pred_check_branch
        %145 = sbr.rel (%p143) target = $region24
      $region23: #{conv_batch_norm.2} parent=19 // pred_region
        %p146 = scmp.lt.s32.totalorder %s17, 1
        %s147 = scalar_select %p146, %s17, 1
        %s148 = smul.addr %s147, 4
        %s149 = scalar_lea.vmem %s0, %s148
      $region24: #{conv_batch_norm.2} parent=19 // pred_fallthru
        _
    $region20: #{conv_batch_norm.2} parent=5 // pred_fallthru
      _
    %p150 = scmp.le.s32.totalorder 1, %s10
    %p151 = scmp.lt.s32.totalorder %s10, 3
    %p152 = pnand %p150, %p151
    %p153 = pneg %p152
    // Predicated region
    $region25: #{conv_batch_norm.2} parent=5 // pred_check
      _
    $region26: #{conv_batch_norm.2} parent=5 // pred_check_branch
      %155 = sbr.rel (%p152) target = $region28
    $region27: #{conv_batch_norm.2} parent=5 // pred_region
      %s156 = ssub.s32 %s10, 1
      %p157 = scmp.lt.s32.totalorder %s19, 1
      %s158 = scalar_select %p157, %s19, 1
      %s159 = smul.addr %s158, 4
      %s160 = scalar_lea.vmem %s0, %s159
      %p161 = pneg %p48
      %p162 = pneg %p45
      %p163 = pneg %p69
      %p164 = pneg %p66
      %p165 = pneg %p95
      %p166 = pneg %p92
      %p167 = scmp.lt.s32.totalorder %s19, 1
      %s168 = scalar_select %p167, %s19, 1
      %s169 = smul.addr %s168, 8
      %s170 = scalar_lea.vmem %s2, %s169
      %p171 = pneg %p121
      %p172 = pneg %p118
      %p173 = scmp.lt.s32.totalorder %s19, 1
      %s174 = scalar_select %p173, %s19, 1
      %s175 = smul.addr %s174, 8
      %s176 = scalar_lea.vmem %s3, %s175
      %p177 = scmp.lt.s32.totalorder %s19, 1
      %s178 = scalar_select %p177, %s19, 1
      %s179 = smul.addr %s178, 4
      %s180 = scalar_lea.vmem %s0, %s179
      %p181 = scmp.lt.s32.totalorder %s19, 1
      %s182 = scalar_select %p181, %s19, 1
      %s183 = smul.addr %s182, 8
      %s184 = scalar_lea.vmem %s2, %s183
      %p185 = scmp.lt.s32.totalorder %s19, 1
      %s186 = scalar_select %p185, %s19, 1
      %s187 = smul.addr %s186, 8
      %s188 = scalar_lea.vmem %s3, %s187
      %p189 = scmp.eq.s32.totalorder %s20, 0
      // Predicated region
      $region29: #{conv_batch_norm.2} parent=27 // pred_check
        %p190 = pneg %p189
      $region30: #{conv_batch_norm.2} parent=27 // pred_check_branch
        %192 = sbr.rel (%p190) target = $region32
      $region31: #{conv_batch_norm.2} parent=27 // pred_region
        %vm193 = vcmask 7168
        %194 = vst.msk [vmem:[%s184] sm:$0xff] %vm193, 0.0
        %195 = vst.msk [vmem:[%s188] sm:$0xff] %vm193, 0.0
      $region32: #{conv_batch_norm.2} parent=27 // pred_fallthru
        _
      %vm196 = vcmask 113664
      %197 = vst.msk [vmem:[#allocation2] sm:$0xff] %vm196, 0.0
      %198 = vst.msk [vmem:[#allocation2 + $0x8] sm:$0xff] %vm196, 0.0
      %199 = vst.msk [vmem:[#allocation2 + $0x10] sm:$0xff] %vm196, 0.0
      %200 = vst.msk [vmem:[#allocation2 + $0x18] sm:$0xff] %vm196, 0.0
      %201 = vst.msk [vmem:[#allocation2 + $0x20] sm:$0xff] %vm196, 0.0
      %202 = vst.msk [vmem:[#allocation2 + $0x28] sm:$0xff] %vm196, 0.0
      %v203 = vld [vmem:[%s180] sm:$0xf]
      %vm204 = vcmask 109568
      %205 = vst.msk [vmem:[#allocation2] sm:$0xf] %vm204, %v203
      %v206 = vld [vmem:[%s180] sm:$0xf]
      %208 = vrot.lane.b32.xlu0 %v206, 127
      %v209 = vpop.permute.xlu0 %208
      %211 = vst.msk [vmem:[#allocation2 + $0x10] sm:$0xf] %vm204, %v209
      %v212 = vld [vmem:[%s180] sm:$0xf]
      %214 = vrot.lane.b32.xlu0 %v212, 126
      %v215 = vpop.permute.xlu0 %214
      %217 = vst.msk [vmem:[#allocation2 + $0x20] sm:$0xf] %vm204, %v215
      %v218 = vld [vmem:[%s1] sm:$0xff]
      %v219 = vld [vmem:[#allocation2] sm:$0xff]
      %v220 = vld [vmem:[#allocation2 + $0x8] sm:$0xff]
      %v221 = vld [vmem:[#allocation2 + $0x10] sm:$0xff]
      %v222 = vld [vmem:[#allocation2 + $0x18] sm:$0xff]
      %v223 = vld [vmem:[#allocation2 + $0x20] sm:$0xff]
      %v224 = vld [vmem:[#allocation2 + $0x28] sm:$0xff]
      %vm225 = vcmask 392192
      %v227 = vsel %vm225, %v218, 0
      %229 = vmatpush.msra.mxu0 0.0
      %230 = vmatpush.msra.mxu0 0.0
      %231 = vmatpush.msra.mxu0 0.0
      %232 = vmatpush.msra.mxu0 0.0
      %233 = vmatpush.msra.mxu0 0.0
      %234 = vmatpush.msra.mxu0 0.0
      %235 = vmatpush.msra.mxu0 0.0
      %236 = vmatpush.msra.mxu0 0.0
      %237 = vmatpush.msra.mxu0 0.0
      %238 = vmatpush.msra.mxu0 0.0
      %239 = vmatpush.msra.mxu0 %v224
      %240 = vmatpush.msra.mxu0 %v223
      %241 = vmatpush.msra.mxu0 %v222
      %242 = vmatpush.msra.mxu0 %v221
      %243 = vmatpush.msra.mxu0 %v220
      %244 = vmatpush.msra.mxu0 %v219
      %245 = vmatmul.f32.gmra.mxu0 %v227
      %v246 = vpop.f32.mrf.mxu0
      %v247 = vadd.f32 0.0, %v246
      %248 = vdwg.mxu0
      %v249 = vld [vmem:[%s184] sm:$0xff]
      %v250 = vsel %vm196, %v247, 0.0
      %251 = vadd.xlane.f32.xlu0 %v250
      %v252 = vpop.xlane.xlu0 %251
      %v253 = vadd.f32 %v249, %v252
      %vm254 = vcmask 7168
      %255 = vst.msk [vmem:[%s184] sm:$0xff] %vm254, %v253
      %v256 = vld [vmem:[%s188] sm:$0xff]
      %v257 = vmul.f32 %v247, %v247
      %v258 = vsel %vm196, %v257, 0.0
      %259 = vadd.xlane.f32.xlu0 %v258
      %v260 = vpop.xlane.xlu0 %259
      %v261 = vadd.f32 %v256, %v260
      %262 = vst.msk [vmem:[%s188] sm:$0xff] %vm254, %v261
      %p263 = scmp.lt.s32.totalorder %s19, 1
      %s264 = scalar_select %p263, %s19, 1
      %s265 = smul.addr %s264, 8
      %s266 = scalar_lea.vmem %s2, %s265
      %p267 = scmp.lt.s32.totalorder %s19, 1
      %s268 = scalar_select %p267, %s19, 1
      %s269 = smul.addr %s268, 8
      %s270 = scalar_lea.vmem %s3, %s269
      // Predicated region
      $region33: #{conv_batch_norm.2} parent=27 // pred_check
        %p271 = pneg %p92
      $region34: #{conv_batch_norm.2} parent=27 // pred_check_branch
        %273 = sbr.rel (%p271) target = $region36
      $region35: #{conv_batch_norm.2} parent=27 // pred_region
        _
      $region36: #{conv_batch_norm.2} parent=27 // pred_fallthru
        _
      // Predicated region
      $region37: #{conv_batch_norm.2} parent=27 // pred_check
        %p274 = pneg %p118
      $region38: #{conv_batch_norm.2} parent=27 // pred_check_branch
        %276 = sbr.rel (%p274) target = $region40
      $region39: #{conv_batch_norm.2} parent=27 // pred_region
        _
      $region40: #{conv_batch_norm.2} parent=27 // pred_fallthru
        _
    $region28: #{conv_batch_norm.2} parent=5 // pred_fallthru
      _
    %p277 = scmp.le.s32.totalorder 2, %s10
    // Predicated region
    $region41: #{conv_batch_norm.2} parent=5 // pred_check
      %p278 = pneg %p277
    $region42: #{conv_batch_norm.2} parent=5 // pred_check_branch
      %280 = sbr.rel (%p278) target = $region44
    $region43: #{conv_batch_norm.2} parent=5 // pred_region
      %s281 = ssub.s32 %s10, 2
      // Predicated region
      $region45: #{conv_batch_norm.2} parent=43 // pred_check
        %p282 = pneg %p98
      $region46: #{conv_batch_norm.2} parent=43 // pred_check_branch
        %284 = sbr.rel (%p282) target = $region48
      $region47: #{conv_batch_norm.2} parent=43 // pred_region
        %p285 = scmp.lt.s32.totalorder %s21, 1
        %s286 = scalar_select %p285, %s21, 1
        %s287 = smul.addr %s286, 8
        %s288 = scalar_lea.vmem %s2, %s287
      $region48: #{conv_batch_norm.2} parent=43 // pred_fallthru
        _
      // Predicated region
      $region49: #{conv_batch_norm.2} parent=43 // pred_check
        %p289 = pneg %p124
      $region50: #{conv_batch_norm.2} parent=43 // pred_check_branch
        %291 = sbr.rel (%p289) target = $region52
      $region51: #{conv_batch_norm.2} parent=43 // pred_region
        %p292 = scmp.lt.s32.totalorder %s21, 1
        %s293 = scalar_select %p292, %s21, 1
        %s294 = smul.addr %s293, 8
        %s295 = scalar_lea.vmem %s3, %s294
      $region52: #{conv_batch_norm.2} parent=43 // pred_fallthru
        _
    $region44: #{conv_batch_norm.2} parent=5 // pred_fallthru
      _
  $region6: #{conv_batch_norm.2} parent=0 // loop_footer
    %s14 = sadd.s32 1, %s10
  $region7: #{conv_batch_norm.2} parent=0 // loop_footer_branch
    %9 = sbr.rel target = $region3
  $region8: #{conv_batch_norm.2} parent=0 // loop_exit
    _

// kernel: conv_batch_norm.3
$region0: #{conv_batch_norm.3}
  #allocation0 [shape = 'u32[]', space=smem, size = 0x4, offset = 0x4, fixed_abs, tag = 'smem constant byte address 0x4 - core index']
  #allocation1 [shape = 'u32[72,128]{1,0:T(1,128)}', space=vmem, size = 0x9000, scoped, tag = 'internal scratch']
  #allocation2 [shape = 'f32[48,14]{1,0:T(8,128)}', space=vmem, size = 0x6000, scoped, tag = 'scratch operand']
  %s0 = inlined_call_operand.vmem [shape: f32[2,4,16], index: 0, kind: input, shape index: {}]
  %s1 = inlined_call_operand.vmem [shape: f32[8,48], index: 1, kind: input, shape index: {}]
  %s2 = inlined_call_operand.vmem [shape: f32[8,1], index: 2, kind: input, shape index: {}]
  %s3 = inlined_call_operand.vmem [shape: f32[8,1], index: 3, kind: input, shape index: {}]
  %s4 = inlined_call_operand.hbm [shape: f32[2,8,14], index: 4, kind: output, shape index: {}]
  %s5 = sld [smem:[#allocation0]]
  $region49: #{conv_batch_norm.3} parent=0
    _
  %s7 = ssub.s32 1, %s5
  %s8 = scalar_select 0, %s7, %s5
  $region1: #{conv_batch_norm.3} parent=0
    #allocation3 [shape = 'u8[8192]{0}', space=vmem, size = 0x2000, scoped, tag = 'output window, operand 0']
    #allocation4 [shape = 's32[2]{0}', space=sflag, size = 0x8, scoped, tag = 'scoped memory for conv_batch_norm.3']
    %9 = vsyncpa [#allocation4], 0
    %s10 = scalar_lea.sflag [#allocation4], 1
    %11 = vsyncpa %s10, 0
    loop: start=0, step=1, limit=4
    $region2: #{conv_batch_norm.3} parent=1 // loop_pre_header
      _
    $region3: #{conv_batch_norm.3} parent=1 // loop_header
      %s13 = sphi 0, %s17
      %p14 = scmp.ge.s32.totalorder %s13, 4
      %s20 = sphi 0, %s32
      %s21 = sphi 0, %s28
      %s22 = sphi 0, %s20
      %s23 = sphi 0, %s21
      %s24 = sphi 0, %s22
      %s25 = sphi 0, %s23
      %s35 = sphi 0, %s37
      %s38 = sphi 0, %s35
      %s39 = sphi 0, %s38
      %s55 = sphi 0, %s39
      %s59 = sphi 0, %s59
      %s61 = sphi 0, %s59
      %s62 = sphi 0, %s61
      %s76 = sphi 0, %s62
      %s80 = sphi 0, %s80
      %s82 = sphi 0, %s80
      %s83 = sphi 0, %s82
      %s97 = sphi 0, %s83
      %s101 = sphi 0, %s101
      %s103 = sphi 0, %s101
      %s104 = sphi 0, %s103
      %s118 = sphi 0, %s104
      %s126 = sphi 0, %s128
      %s129 = sphi 0, %s126
      %s130 = sphi 0, %s129
      %s146 = sphi 0, %s130
    $region4: #{conv_batch_norm.3} parent=1 // loop_header_branch
      %16 = sbr.rel (%p14) target = $region8
    $region5: #{conv_batch_norm.3} parent=1 // loop_body
      %s18 = ssub.s32 %s13, 1
      %s19 = ssub.s32 %s13, 2
      %s26 = sadd.s32 1, %s21
      %p27 = scmp.ge.s32.totalorder %s26, 1
      %s28 = scalar_select %p27, 0, %s26
      %s29 = sadd.s32 1, %s20
      %s30 = scalar_select %p27, %s29, %s20
      %p31 = scmp.ge.s32.totalorder %s30, 2
      %s32 = scalar_select %p31, 0, %s30
      %s33 = ssub.s32 %s20, %s32
      %p34 = scmp.eq.s32.totalorder %s33, 0
      %s36 = sadd.s32 %s35, 1
      %s37 = scalar_select %p34, %s35, %s36
      %p40 = pneg %p34
      %p41 = scmp.eq.s32.totalorder %s13, 1
      %p42 = por %p40, %p41
      %p43 = scmp.ne.s32.totalorder %s35, %s38
      %p44 = scmp.eq.s32.totalorder %s13, 0
      %p45 = por %p43, %p44
      %p46 = scmp.ne.s32.totalorder %s35, %s38
      %p47 = scmp.eq.s32.totalorder %s18, 1
      %p48 = por %p46, %p47
      %p49 = scmp.ne.s32.totalorder %s38, %s39
      %p50 = scmp.eq.s32.totalorder %s18, 0
      %p51 = por %p49, %p50
      %p52 = scmp.ne.s32.totalorder %s38, %s39
      %p53 = scmp.eq.s32.totalorder %s19, 1
      %p54 = por %p52, %p53
      %p56 = scmp.ne.s32.totalorder %s39, %s55
      %p57 = scmp.eq.s32.totalorder %s19, 0
      %p58 = por %p56, %p57
      %s60 = sadd.s32 %s59, 1
      %p63 = scmp.eq.s32.totalorder %s13, 1
      %p64 = scmp.ne.s32.totalorder %s59, %s61
      %p65 = scmp.eq.s32.totalorder %s13, 0
      %p66 = por %p64, %p65
      %p67 = scmp.ne.s32.totalorder %s59, %s61
      %p68 = scmp.eq.s32.totalorder %s18, 1
      %p69 = por %p67, %p68
      %p70 = scmp.ne.s32.totalorder %s61, %s62
      %p71 = scmp.eq.s32.totalorder %s18, 0
      %p72 = por %p70, %p71
      %p73 = scmp.ne.s32.totalorder %s61, %s62
      %p74 = scmp.eq.s32.totalorder %s19, 1
      %p75 = por %p73, %p74
      %p77 = scmp.ne.s32.totalorder %s62, %s76
      %p78 = scmp.eq.s32.totalorder %s19, 0
      %p79 = por %p77, %p78
      %s81 = sadd.s32 %s80, 1
      %p84 = scmp.eq.s32.totalorder %s13, 1
      %p85 = scmp.ne.s32.totalorder %s80, %s82
      %p86 = scmp.eq.s32.totalorder %s13, 0
      %p87 = por %p85, %p86
      %p88 = scmp.ne.s32.totalorder %s80, %s82
      %p89 = scmp.eq.s32.totalorder %s18, 1
      %p90 = por %p88, %p89
      %p91 = scmp.ne.s32.totalorder %s82, %s83
      %p92 = scmp.eq.s32.totalorder %s18, 0
      %p93 = por %p91, %p92
      %p94 = scmp.ne.s32.totalorder %s82, %s83
      %p95 = scmp.eq.s32.totalorder %s19, 1
      %p96 = por %p94, %p95
      %p98 = scmp.ne.s32.totalorder %s83, %s97
      %p99 = scmp.eq.s32.totalorder %s19, 0
      %p100 = por %p98, %p99
      %s102 = sadd.s32 %s101, 1
      %p105 = scmp.eq.s32.totalorder %s13, 1
      %p106 = scmp.ne.s32.totalorder %s101, %s103
      %p107 = scmp.eq.s32.totalorder %s13, 0
      %p108 = por %p106, %p107
      %p109 = scmp.ne.s32.totalorder %s101, %s103
      %p110 = scmp.eq.s32.totalorder %s18, 1
      %p111 = por %p109, %p110
      %p112 = scmp.ne.s32.totalorder %s103, %s104
      %p113 = scmp.eq.s32.totalorder %s18, 0
      %p114 = por %p112, %p113
      %p115 = scmp.ne.s32.totalorder %s103, %s104
      %p116 = scmp.eq.s32.totalorder %s19, 1
      %p117 = por %p115, %p116
      %p119 = scmp.ne.s32.totalorder %s104, %s118
      %p120 = scmp.eq.s32.totalorder %s19, 0
      %p121 = por %p119, %p120
      %s122 = ssub.s32 %s20, %s32
      %s123 = ssub.s32 %s21, %s28
      %s124 = sor.u32 %s122, %s123
      %p125 = scmp.eq.s32.totalorder %s124, 0
      %s127 = sadd.s32 %s126, 1
      %s128 = scalar_select %p125, %s126, %s127
      %p131 = pneg %p125
      %p132 = scmp.eq.s32.totalorder %s13, 1
      %p133 = por %p131, %p132
      %p134 = scmp.ne.s32.totalorder %s126, %s129
      %p135 = scmp.eq.s32.totalorder %s13, 0
      %p136 = por %p134, %p135
      %p137 = scmp.ne.s32.totalorder %s126, %s129
      %p138 = scmp.eq.s32.totalorder %s18, 1
      %p139 = por %p137, %p138
      %p140 = scmp.ne.s32.totalorder %s129, %s130
      %p141 = scmp.eq.s32.totalorder %s18, 0
      %p142 = por %p140, %p141
      %p143 = scmp.ne.s32.totalorder %s129, %s130
      %p144 = scmp.eq.s32.totalorder %s19, 1
      %p145 = por %p143, %p144
      %p147 = scmp.ne.s32.totalorder %s130, %s146
      %p148 = scmp.eq.s32.totalorder %s19, 0
      %p149 = por %p147, %p148
      %p150 = scmp.le.s32.totalorder 1, %s13
      %p151 = scmp.lt.s32.totalorder %s13, 3
      %p152 = pnand %p150, %p151
      %p153 = pneg %p152
      // Predicated region
      $region9: #{conv_batch_norm.3} parent=5 // pred_check
        _
      $region10: #{conv_batch_norm.3} parent=5 // pred_check_branch
        %155 = sbr.rel (%p152) target = $region12
      $region11: #{conv_batch_norm.3} parent=5 // pred_region
        %s156 = ssub.s32 %s13, 1
        // Predicated region
        $region13: #{conv_batch_norm.3} parent=11 // pred_check
          %p157 = pneg %p72
        $region14: #{conv_batch_norm.3} parent=11 // pred_check_branch
          %159 = sbr.rel (%p157) target = $region16
        $region15: #{conv_batch_norm.3} parent=11 // pred_region
          _
        $region16: #{conv_batch_norm.3} parent=11 // pred_fallthru
          _
        // Predicated region
        $region17: #{conv_batch_norm.3} parent=11 // pred_check
          %p160 = pneg %p93
        $region18: #{conv_batch_norm.3} parent=11 // pred_check_branch
          %162 = sbr.rel (%p160) target = $region20
        $region19: #{conv_batch_norm.3} parent=11 // pred_region
          _
        $region20: #{conv_batch_norm.3} parent=11 // pred_fallthru
          _
        // Predicated region
        $region21: #{conv_batch_norm.3} parent=11 // pred_check
          %p163 = pneg %p114
        $region22: #{conv_batch_norm.3} parent=11 // pred_check_branch
          %165 = sbr.rel (%p163) target = $region24
        $region23: #{conv_batch_norm.3} parent=11 // pred_region
          _
        $region24: #{conv_batch_norm.3} parent=11 // pred_fallthru
          _
      $region12: #{conv_batch_norm.3} parent=5 // pred_fallthru
        _
      %p166 = scmp.lt.s32.totalorder %s13, 2
      // Predicated region
      $region25: #{conv_batch_norm.3} parent=5 // pred_check
        %p167 = pneg %p166
      $region26: #{conv_batch_norm.3} parent=5 // pred_check_branch
        %169 = sbr.rel (%p167) target = $region28
      $region27: #{conv_batch_norm.3} parent=5 // pred_region
        // Predicated region
        $region29: #{conv_batch_norm.3} parent=27 // pred_check
          %p170 = pneg %p45
        $region30: #{conv_batch_norm.3} parent=27 // pred_check_branch
          %172 = sbr.rel (%p170) target = $region32
        $region31: #{conv_batch_norm.3} parent=27 // pred_region
          %p173 = scmp.lt.s32.totalorder %s20, 1
          %s174 = scalar_select %p173, %s20, 1
          %s175 = smul.addr %s174, 4
          %s176 = scalar_lea.vmem %s0, %s175
        $region32: #{conv_batch_norm.3} parent=27 // pred_fallthru
          _
      $region28: #{conv_batch_norm.3} parent=5 // pred_fallthru
        _
      %p177 = scmp.le.s32.totalorder 1, %s13
      %p178 = scmp.lt.s32.totalorder %s13, 3
      %p179 = pnand %p177, %p178
      %p180 = pneg %p179
      // Predicated region
      $region33: #{conv_batch_norm.3} parent=5 // pred_check
        _
      $region34: #{conv_batch_norm.3} parent=5 // pred_check_branch
        %182 = sbr.rel (%p179) target = $region36
      $region35: #{conv_batch_norm.3} parent=5 // pred_region
        %s183 = ssub.s32 %s13, 1
        %p184 = scmp.lt.s32.totalorder %s22, 1
        %s185 = scalar_select %p184, %s22, 1
        %s186 = smul.addr %s185, 4
        %s187 = scalar_lea.vmem %s0, %s186
        %p188 = pneg %p51
        %p189 = pneg %p48
        %p190 = pneg %p72
        %p191 = pneg %p69
        %p192 = pneg %p93
        %p193 = pneg %p90
        %p194 = pneg %p114
        %p195 = pneg %p111
        %p196 = pneg %p142
        %p197 = pneg %p139
        %s198 = sand.u32 %s129, 1
        %s199 = scalar_lea.sflag [#allocation4], %s198
        %s200 = sand.u32 %s129, 1
        %s201 = smul.addr %s200, 8
        %s202 = scalar_lea.vmem [#allocation3], %s201
        %p203 = scmp.lt.s32.totalorder %s22, 1
        %s204 = scalar_select %p203, %s22, 1
        %s205 = smul.addr %s204, 4
        %s206 = scalar_lea.vmem %s0, %s205
        %vm207 = vcmask 113664
        %208 = vst.msk [vmem:[#allocation2] sm:$0xff] %vm207, 0.0
        %209 = vst.msk [vmem:[#allocation2 + $0x8] sm:$0xff] %vm207, 0.0
        %210 = vst.msk [vmem:[#allocation2 + $0x10] sm:$0xff] %vm207, 0.0
        %211 = vst.msk [vmem:[#allocation2 + $0x18] sm:$0xff] %vm207, 0.0
        %212 = vst.msk [vmem:[#allocation2 + $0x20] sm:$0xff] %vm207, 0.0
        %213 = vst.msk [vmem:[#allocation2 + $0x28] sm:$0xff] %vm207, 0.0
        %v214 = vld [vmem:[%s206] sm:$0xf]
        %vm215 = vcmask 109568
        %216 = vst.msk [vmem:[#allocation2] sm:$0xf] %vm215, %v214
        %v217 = vld [vmem:[%s206] sm:$0xf]
        %219 = vrot.lane.b32.xlu0 %v217, 127
        %v220 = vpop.permute.xlu0 %219
        %222 = vst.msk [vmem:[#allocation2 + $0x10] sm:$0xf] %vm215, %v220
        %v223 = vld [vmem:[%s206] sm:$0xf]
        %225 = vrot.lane.b32.xlu0 %v223, 126
        %v226 = vpop.permute.xlu0 %225
        %228 = vst.msk [vmem:[#allocation2 + $0x20] sm:$0xf] %vm215, %v226
        %v229 = vld [vmem:[%s1] sm:$0xff]
        %v230 = vld [vmem:[#allocation2] sm:$0xff]
        %v231 = vld [vmem:[#allocation2 + $0x8] sm:$0xff]
        %v232 = vld [vmem:[#allocation2 + $0x10] sm:$0xff]
        %v233 = vld [vmem:[#allocation2 + $0x18] sm:$0xff]
        %v234 = vld [vmem:[#allocation2 + $0x20] sm:$0xff]
        %v235 = vld [vmem:[#allocation2 + $0x28] sm:$0xff]
        %vm236 = vcmask 392192
        %v238 = vsel %vm236, %v229, 0
        %240 = vmatpush.msra.mxu0 0.0
        %241 = vmatpush.msra.mxu0 0.0
        %242 = vmatpush.msra.mxu0 0.0
        %243 = vmatpush.msra.mxu0 0.0
        %244 = vmatpush.msra.mxu0 0.0
        %245 = vmatpush.msra.mxu0 0.0
        %246 = vmatpush.msra.mxu0 0.0
        %247 = vmatpush.msra.mxu0 0.0
        %248 = vmatpush.msra.mxu0 0.0
        %249 = vmatpush.msra.mxu0 0.0
        %250 = vmatpush.msra.mxu0 %v235
        %251 = vmatpush.msra.mxu0 %v234
        %252 = vmatpush.msra.mxu0 %v233
        %253 = vmatpush.msra.mxu0 %v232
        %254 = vmatpush.msra.mxu0 %v231
        %255 = vmatpush.msra.mxu0 %v230
        %256 = vmatmul.f32.gmra.mxu0 %v238
        %v257 = vpop.f32.mrf.mxu0
        %v258 = vadd.f32 0.0, %v257
        %259 = vdwg.mxu0
        %v260 = vld [vmem:[%s2] sm:$0xff]
        %262 = vset.pattern.permute.xlu0 0
        %263 = vperm.xlu0 %262, %v260
        %v264 = vpop.permute.xlu0 %263
        %v266 = vmul.f32 %v258, %v264
        %v267 = vld [vmem:[%s3] sm:$0xff]
        %269 = vset.pattern.permute.xlu0 0
        %270 = vperm.xlu0 %269, %v267
        %v271 = vpop.permute.xlu0 %270
        %v273 = vadd.f32 %v266, %v271
        %v274 = vmax.f32 %v273, 0.0
        %275 = vst.msk [vmem:[%s202] sm:$0xff] %vm207, %v274
        %s276 = sand.u32 %s129, 1
        %s277 = scalar_lea.sflag [#allocation4], %s276
        %s278 = sand.u32 %s129, 1
        %s279 = smul.addr %s278, 8
        %s280 = scalar_lea.vmem [#allocation3], %s279
        // Predicated region
        $region37: #{conv_batch_norm.3} parent=35 // pred_check
          %p281 = pneg %p139
        $region38: #{conv_batch_norm.3} parent=35 // pred_check_branch
          %283 = sbr.rel (%p281) target = $region40
        $region39: #{conv_batch_norm.3} parent=35 // pred_region
          %285 = vsyncadd %s277, 0
          %s286 = sadd.s32 %s23, %s22
          %s287 = smul.addr %s286, 8
          %s288 = scalar_lea.hbm %s4, %s287
          %s290 = sshll.u32 %s280, 4
          %s291 = int_to_ptr.vmem [resolvable:$true] %s290
          %s292 = sshll.u32 %s288, 4
          %s293 = int_to_ptr.hbm [resolvable:$true] %s292
          %295 = dma.vmem_to_hbm [thread:$0]  %s291, 128, %s293, %s277
        $region40: #{conv_batch_norm.3} parent=35 // pred_fallthru
          _
      $region36: #{conv_batch_norm.3} parent=5 // pred_fallthru
        _
      %p296 = scmp.le.s32.totalorder 2, %s13
      // Predicated region
      $region41: #{conv_batch_norm.3} parent=5 // pred_check
        %p297 = pneg %p296
      $region42: #{conv_batch_norm.3} parent=5 // pred_check_branch
        %299 = sbr.rel (%p297) target = $region44
      $region43: #{conv_batch_norm.3} parent=5 // pred_region
        %s300 = ssub.s32 %s13, 2
        // Predicated region
        $region45: #{conv_batch_norm.3} parent=43 // pred_check
          %p301 = pneg %p145
        $region46: #{conv_batch_norm.3} parent=43 // pred_check_branch
          %303 = sbr.rel (%p301) target = $region48
        $region47: #{conv_batch_norm.3} parent=43 // pred_region
          %s304 = sand.u32 %s130, 1
          %s305 = scalar_lea.sflag [#allocation4], %s304
          %s306 = sand.u32 %s130, 1
          %s307 = smul.addr %s306, 8
          %s308 = scalar_lea.vmem [#allocation3], %s307
          %310 = dma.done %s305, 128
        $region48: #{conv_batch_norm.3} parent=43 // pred_fallthru
          _
      $region44: #{conv_batch_norm.3} parent=5 // pred_fallthru
        _
    $region6: #{conv_batch_norm.3} parent=1 // loop_footer
      %s17 = sadd.s32 1, %s13
    $region7: #{conv_batch_norm.3} parent=1 // loop_footer_branch
      %12 = sbr.rel target = $region3
    $region8: #{conv_batch_norm.3} parent=1 // loop_exit
      _
    %311 = vsyncpa [#allocation4], 1
    %s312 = scalar_lea.sflag [#allocation4], 1
    %313 = vsyncpa %s312, 1

</llo_original>
